<compile_context>
chip_gen: v5e
topology: v5e:2x2
jax: 0.10.0
libtpu: 0.0.40
codegen_flags: <defaults>
</compile_context>

<pallas_src>
import functools

import jax
import jax.numpy as jnp
from jax import lax
from jax.experimental import pallas as pl
from jax.experimental.pallas import tpu as pltpu

MARGIN = 2.0
EPS = 1e-6  # F.pairwise_distance default eps (added to the difference, as in torch)


def _contrastive_loss_kernel(o1_ref, o2_ref, lab_ref, out_ref, acc_ref, *,
                             block_b, n_steps, total_rows, needs_mask):
    p = pl.program_id(0)   # batch shard (both TCs on v7x; serial elsewhere)
    i = pl.program_id(1)   # streaming/reduction steps within a shard

    @pl.when(i == 0)
    def _():
        acc_ref[...] = jnp.zeros_like(acc_ref)

    # Per-row squared euclidean distance (PyTorch adds eps to the difference).
    diff = o1_ref[...].astype(jnp.float32) - o2_ref[...].astype(jnp.float32) + EPS
    sq = jnp.sum(diff * diff, axis=-1, keepdims=True)        # (block_b, 1)
    d = jnp.sqrt(sq)                                          # EUP (off the VALU path)
    hinge = jnp.maximum(MARGIN - d, 0.0)

    lab = lab_ref[...]                                        # (block_b, 1) per-step tile

    # Use sq directly for the (1 - label) term; only the hinge needs d.
    per_row = (1.0 - lab) * sq + lab * (hinge * hinge)

    if needs_mask:
        # Ragged boundary blocks: rows past the true batch carry garbage
        # (no wrapper padding) — zero them before accumulation.
        row_start = (p * n_steps + i) * block_b
        rows = row_start + lax.broadcasted_iota(jnp.int32, (block_b, 1), 0)
        per_row = jnp.where(rows < total_rows, per_row, 0.0)

    # Scalar accumulator: one reduce + one tiny store per step (no lane-sparse
    # vector accumulator traffic).
    acc_ref[...] += jnp.sum(per_row, axis=0, keepdims=True)   # (1, 1)

    @pl.when(i == n_steps - 1)
    def _():
        # Lane-dense, sublane-legal partial-sum block for this shard.
        out_ref[...] = jnp.broadcast_to(acc_ref[...], (8, 128))


def contrastive_loss(output1, output2, label, *, max_block_rows=None):
    """output1, output2: (B, D); label: (B,) or (B, 1). Returns scalar loss."""
    B, D = output1.shape
    label = jnp.reshape(label, (B, 1)).astype(jnp.float32)
    dtype_bytes = jnp.dtype(output1.dtype).itemsize

    # --- Generation-aware VMEM budgeting --------------------------------
    try:
        vmem_cap = int(pltpu.get_tpu_info().vmem_capacity_bytes)
    except Exception:
        vmem_cap = 64 << 20                       # conservative (v7x per-core)
    big_vmem = vmem_cap >= (96 << 20)             # v5e / v6e: 128 MiB
    feat_budget = (56 << 20) if big_vmem else (24 << 20)   # 2 inputs x 2 buffers
    vmem_ceiling = (96 << 20) if big_vmem else (48 << 20)
    if max_block_rows is None:
        max_block_rows = 8192 if big_vmem else 2048

    # Rows per tile: 2 feature inputs x 2 pipeline buffers, actual dtype width.
    rows_by_budget = max(8, (feat_budget // (4 * dtype_bytes * D)) // 8 * 8)
    block_cap = max(8, int(min(max_block_rows, rows_by_budget)) // 8 * 8)

    # --- Grid sizing: NO feature padding; ragged last block is masked ----
    def _plan(n_par_):
        shard = -(-B // n_par_)
        steps = -(-shard // block_cap)
        bb = max(8, (-(-shard // steps) + 7) // 8 * 8)
        return steps, bb

    n_par = 2 if B >= 512 else 1                  # split mid-size batches on v7x
    n_steps, block_b = _plan(n_par)
    # Every block must START in-bounds (boundary blocks may extend past B).
    if n_par > 1 and (n_par * n_steps - 1) * block_b >= B:
        n_par = 1
        n_steps, block_b = _plan(1)
    needs_mask = (n_par * n_steps * block_b) != B

    kernel = functools.partial(
        _contrastive_loss_kernel,
        block_b=block_b, n_steps=n_steps, total_rows=B, needs_mask=needs_mask)

    # VMEM accounting: narrow (.,1) / (8,128) tiles are lane-padded to 128.
    vmem_needed = (4 * block_b * D * dtype_bytes          # features: 2 inputs x 2 bufs
                   + 2 * block_b * 128 * 4                # label tiles (lane padded)
                   + 3 * 8 * 128 * 4                      # out (2 bufs) + acc
                   + (2 << 20))                           # headroom / internal scratch
    vmem_limit = int(min(vmem_ceiling, max(32 << 20, vmem_needed)))

    cost = pl.CostEstimate(
        flops=int(3 * B * D + 10 * B),
        transcendentals=int(B),
        bytes_accessed=int(2 * B * D * dtype_bytes + 4 * B + n_par * 8 * 128 * 4))

    partials = pl.pallas_call(
        kernel,
        out_shape=jax.ShapeDtypeStruct((n_par * 8, 128), jnp.float32),
        grid_spec=pltpu.PrefetchScalarGridSpec(
            num_scalar_prefetch=0,
            grid=(n_par, n_steps),
            in_specs=[
                pl.BlockSpec((block_b, D), lambda p, i: (p * n_steps + i, 0)),
                pl.BlockSpec((block_b, D), lambda p, i: (p * n_steps + i, 0)),
                pl.BlockSpec((block_b, 1), lambda p, i: (p * n_steps + i, 0)),
            ],
            out_specs=pl.BlockSpec((8, 128), lambda p, i: (p, 0)),
            scratch_shapes=[pltpu.VMEM((1, 1), jnp.float32)],
        ),
        compiler_params=pltpu.CompilerParams(
            dimension_semantics=("parallel", "arbitrary"),
            vmem_limit_bytes=vmem_limit,
        ),
        cost_estimate=cost,
    )(output1, output2, label)

    # Tiny (n_par-element) combine + mean in plain JAX.
    return jnp.sum(partials[::8, 0]) / jnp.float32(B)


def _reference(output1, output2, label):
    # pure-JAX reference of the PyTorch forward
    diff = output1 - output2 + EPS
    d = jnp.sqrt(jnp.sum(diff * diff, axis=-1, keepdims=True))
    lab = jnp.reshape(label, (-1, 1)).astype(jnp.float32)
    loss = (1.0 - lab) * d**2 + lab * jnp.square(jnp.clip(MARGIN - d, 0.0, None))
    return jnp.mean(loss)


if __name__ == "__main__":
    key = jax.random.PRNGKey(0)
    k1, k2, k3 = jax.random.split(key, 3)

    # Small, TPU-friendly shapes consistent with Siamese feature vectors.
    B, D = 8, 128
    output1 = jax.random.normal(k1, (B, D), dtype=jnp.float32)
    output2 = jax.random.normal(k2, (B, D), dtype=jnp.float32)
    label = jax.random.bernoulli(k3, 0.5, (B, 1)).astype(jnp.float32)

    loss = jax.block_until_ready(contrastive_loss(output1, output2, label))
    ref = _reference(output1, output2, label)
    assert jnp.allclose(loss, ref, rtol=1e-5, atol=1e-5), (loss, ref)

    # Ragged batch (exercises the un-padded boundary block + row-mask path).
    B2 = 20
    o1b = jax.random.normal(k1, (B2, D), dtype=jnp.float32)
    o2b = jax.random.normal(k2, (B2, D), dtype=jnp.float32)
    lb = jax.random.bernoulli(k3, 0.5, (B2, 1)).astype(jnp.float32)
    loss2 = jax.block_until_ready(contrastive_loss(o1b, o2b, lb))
    ref2 = _reference(o1b, o2b, lb)
    assert jnp.allclose(loss2, ref2, rtol=1e-5, atol=1e-5), (loss2, ref2)

    # Two-shard (n_par=2) path + ragged mask (exercises the multi-block output).
    B3, D3 = 650, 32
    o1c = jax.random.normal(k1, (B3, D3), dtype=jnp.float32)
    o2c = jax.random.normal(k2, (B3, D3), dtype=jnp.float32)
    lc = jax.random.bernoulli(k3, 0.5, (B3, 1)).astype(jnp.float32)
    loss3 = jax.block_until_ready(contrastive_loss(o1c, o2c, lc))
    ref3 = _reference(o1c, o2c, lc)
    assert jnp.allclose(loss3, ref3, rtol=1e-4, atol=1e-4), (loss3, ref3)

    print("KERNEL_OK")
</pallas_src>

<mosaic_0001>
module attributes {stable_mosaic.version = 11 : i64} {
  func.func @_contrastive_loss_kernel(%arg0: i32, %arg1: i32, %arg2: memref<8x128xf32, #tpu.memory_space<vmem>>, %arg3: memref<8x128xf32, #tpu.memory_space<vmem>>, %arg4: memref<8x1xf32, #tpu.memory_space<vmem>>, %arg5: memref<8x128xf32, #tpu.memory_space<vmem>>, %arg6: memref<1x1xf32, #tpu.memory_space<vmem>>) attributes {dimension_semantics = [#tpu.dimension_semantics<parallel>, #tpu.dimension_semantics<arbitrary>], iteration_bounds = array<i64: 1, 1>, scalar_prefetch = 0 : i64, scratch_operands = 1 : i64, tpu.core_type = #tpu.core_type<tc>, window_params = [{transform_indices = @transform_0, window_bounds = array<i64: 8, 128>}, {transform_indices = @transform_1, window_bounds = array<i64: 8, 128>}, {transform_indices = @transform_2, window_bounds = array<i64: 8, 1>}, {transform_indices = @transform_3, window_bounds = array<i64: 8, 128>}]} {
    %c0_i32 = arith.constant 0 : i32
    %0 = arith.cmpi eq, %arg1, %c0_i32 : i32
    %1 = arith.extui %0 : i1 to i32
    %c0_i32_0 = arith.constant 0 : i32
    %2 = arith.cmpi ne, %1, %c0_i32_0 : i32
    scf.if %2 {
      %cst_17 = arith.constant 0.000000e+00 : f32
      %31 = vector.broadcast %cst_17 : f32 to vector<1x1xf32>
      %c0_18 = arith.constant 0 : index
      %c0_19 = arith.constant 0 : index
      %32 = vector.load %arg6[%c0_18, %c0_19] : memref<1x1xf32, #tpu.memory_space<vmem>>, vector<1x1xf32>
      tpu.vector_store %arg6[%c0_18, %c0_19], %31 {strides = array<i32>} : memref<1x1xf32, #tpu.memory_space<vmem>>, vector<1x1xf32>,
    } else {
    }
    %c0 = arith.constant 0 : index
    %c0_1 = arith.constant 0 : index
    %3 = vector.load %arg2[%c0, %c0_1] : memref<8x128xf32, #tpu.memory_space<vmem>>, vector<8x128xf32>
    %c0_2 = arith.constant 0 : index
    %c0_3 = arith.constant 0 : index
    %4 = vector.load %arg3[%c0_2, %c0_3] : memref<8x128xf32, #tpu.memory_space<vmem>>, vector<8x128xf32>
    %5 = arith.subf %3, %4 : vector<8x128xf32>
    %cst = arith.constant 9.99999997E-7 : f32
    %6 = vector.broadcast %cst : f32 to vector<8x128xf32>
    %7 = arith.addf %5, %6 : vector<8x128xf32>
    %8 = arith.mulf %7, %7 : vector<8x128xf32>
    %cst_4 = arith.constant dense<0.000000e+00> : vector<8xf32>
    %9 = vector.multi_reduction <add>, %8, %cst_4 [1] : vector<8x128xf32> to vector<8xf32>
    %10 = vector.shape_cast %9 : vector<8xf32> to vector<8x1xf32>
    %11 = math.sqrt %10 : vector<8x1xf32>
    %cst_5 = arith.constant 2.000000e+00 : f32
    %12 = vector.broadcast %cst_5 : f32 to vector<8x1xf32>
    %13 = arith.subf %12, %11 : vector<8x1xf32>
    %cst_6 = arith.constant 0.000000e+00 : f32
    %14 = vector.broadcast %cst_6 : f32 to vector<8x1xf32>
    %15 = arith.maximumf %13, %14 : vector<8x1xf32>
    %c0_7 = arith.constant 0 : index
    %c0_8 = arith.constant 0 : index
    %16 = vector.load %arg4[%c0_7, %c0_8] : memref<8x1xf32, #tpu.memory_space<vmem>>, vector<8x1xf32>
    %cst_9 = arith.constant 1.000000e+00 : f32
    %17 = vector.broadcast %cst_9 : f32 to vector<8x1xf32>
    %18 = arith.subf %17, %16 : vector<8x1xf32>
    %19 = arith.mulf %18, %10 : vector<8x1xf32>
    %20 = arith.mulf %15, %15 : vector<8x1xf32>
    %21 = arith.mulf %16, %20 : vector<8x1xf32>
    %22 = arith.addf %19, %21 : vector<8x1xf32>
    %c0_10 = arith.constant 0 : index
    %c0_11 = arith.constant 0 : index
    %23 = vector.load %arg6[%c0_10, %c0_11] : memref<1x1xf32, #tpu.memory_space<vmem>>, vector<1x1xf32>
    %cst_12 = arith.constant dense<0.000000e+00> : vector<1xf32>
    %24 = vector.multi_reduction <add>, %22, %cst_12 [0] : vector<8x1xf32> to vector<1xf32>
    %25 = vector.shape_cast %24 : vector<1xf32> to vector<1x1xf32>
    %26 = arith.addf %23, %25 : vector<1x1xf32>
    %c0_13 = arith.constant 0 : index
    %c0_14 = arith.constant 0 : index
    %27 = vector.load %arg6[%c0_13, %c0_14] : memref<1x1xf32, #tpu.memory_space<vmem>>, vector<1x1xf32>
    tpu.vector_store %arg6[%c0_13, %c0_14], %26 {strides = array<i32>} : memref<1x1xf32, #tpu.memory_space<vmem>>, vector<1x1xf32>,
    %c0_i32_15 = arith.constant 0 : i32
    %28 = arith.cmpi eq, %arg1, %c0_i32_15 : i32
    %29 = arith.extui %28 : i1 to i32
    %c0_i32_16 = arith.constant 0 : i32
    %30 = arith.cmpi ne, %29, %c0_i32_16 : i32
    scf.if %30 {
      %c0_17 = arith.constant 0 : index
      %c0_18 = arith.constant 0 : index
      %31 = vector.load %arg6[%c0_17, %c0_18] : memref<1x1xf32, #tpu.memory_space<vmem>>, vector<1x1xf32>
      %32 = vector.shape_cast %31 : vector<1x1xf32> to vector<1x1xf32>
      %33 = vector.broadcast %32 : vector<1x1xf32> to vector<8x128xf32>
      %c0_19 = arith.constant 0 : index
      %c0_20 = arith.constant 0 : index
      %34 = vector.load %arg5[%c0_19, %c0_20] : memref<8x128xf32, #tpu.memory_space<vmem>>, vector<8x128xf32>
      tpu.vector_store %arg5[%c0_19, %c0_20], %33 {strides = array<i32>} : memref<8x128xf32, #tpu.memory_space<vmem>>, vector<8x128xf32>,
    } else {
    }
    return
  }
  func.func @transform_0(%arg0: i32, %arg1: i32) -> (i32, i32) {
    %c1_i32 = arith.constant 1 : i32
    %0 = arith.muli %arg0, %c1_i32 : i32
    %1 = arith.addi %0, %arg1 : i32
    %c0_i32 = arith.constant 0 : i32
    %c0_i32_0 = arith.constant 0 : i32
    return %1, %c0_i32 : i32, i32
  }
  func.func @transform_1(%arg0: i32, %arg1: i32) -> (i32, i32) {
    %c1_i32 = arith.constant 1 : i32
    %0 = arith.muli %arg0, %c1_i32 : i32
    %1 = arith.addi %0, %arg1 : i32
    %c0_i32 = arith.constant 0 : i32
    %c0_i32_0 = arith.constant 0 : i32
    return %1, %c0_i32 : i32, i32
  }
  func.func @transform_2(%arg0: i32, %arg1: i32) -> (i32, i32) {
    %c1_i32 = arith.constant 1 : i32
    %0 = arith.muli %arg0, %c1_i32 : i32
    %1 = arith.addi %0, %arg1 : i32
    %c0_i32 = arith.constant 0 : i32
    %c0_i32_0 = arith.constant 0 : i32
    return %1, %c0_i32 : i32, i32
  }
  func.func @transform_3(%arg0: i32, %arg1: i32) -> (i32, i32) {
    %c0_i32 = arith.constant 0 : i32
    %c0_i32_0 = arith.constant 0 : i32
    return %arg0, %c0_i32 : i32, i32
  }
}

</mosaic_0001>

<llo_original>
// kernel: tpu_custom_call.1
$region0: #{tpu_custom_call.1}
  #allocation0 [shape = 'u32[]', space=smem, size = 0x4, offset = 0x4, fixed_abs, tag = 'smem constant byte address 0x4 - core index']
  #allocation1 [shape = 'u32[72,128]{1,0:T(1,128)}', space=vmem, size = 0x9000, scoped, tag = 'internal scratch']
  #allocation2 [shape = 'f32[1,1]{1,0:T(1,128)}', space=vmem, size = 0x200, scoped, tag = 'scratch operand']
  %s0 = inlined_call_operand.vmem [shape: f32[8,128], index: 0, kind: input, shape index: {}]
  %s1 = inlined_call_operand.hbm [shape: f32[8,128], index: 1, kind: input, shape index: {}]
  %s2 = inlined_call_operand.vmem [shape: f32[8,1], index: 2, kind: input, shape index: {}]
  %s3 = inlined_call_operand.hbm [shape: f32[8,128], index: 3, kind: output, shape index: {}]
  %s4 = sld [smem:[#allocation0]]
  $region34: #{tpu_custom_call.1} parent=0
    _
  %s6 = ssub.s32 1, %s4
  %s7 = scalar_select 0, %s6, %s4
  $region1: #{tpu_custom_call.1} parent=0
    #allocation3 [shape = 'u8[4096]{0}', space=vmem, size = 0x1000, scoped, tag = 'input window, operand 1, single buffered']
    #allocation4 [shape = 's32[1]{0}', space=sflag, size = 0x4, scoped, tag = 'scoped memory for tpu_custom_call.1']
    #allocation5 [shape = 's32[1]{0}', space=sflag, size = 0x4, scoped, tag = 'scoped memory for tpu_custom_call.1']
    #allocation6 [shape = 'u8[4096]{0}', space=vmem, size = 0x1000, scoped, tag = 'output window, operand 0, single buffered']
    %8 = vsyncpa [#allocation4], 0
    %9 = vsyncpa [#allocation5], 0
    // Predicated region
    $region2: #{tpu_custom_call.1} parent=1 // pred_check
      _
    $region3: #{tpu_custom_call.1} parent=1 // pred_check_branch
      %11 = sbr.rel (0) target = $region5
    $region4: #{tpu_custom_call.1} parent=1 // pred_region
      %s12 = sadd.s32 0, 0
      %p13 = scmp.lt.s32.totalorder %s12, 0
      %s14 = scalar_select %p13, %s12, 0
      %s15 = smul.addr %s14, 8
      %s16 = scalar_lea.vmem %s0, %s15
      %s17 = sadd.s32 0, 0
    $region5: #{tpu_custom_call.1} parent=1 // pred_fallthru
      _
    // Predicated region
    $region6: #{tpu_custom_call.1} parent=1 // pred_check
      _
    $region7: #{tpu_custom_call.1} parent=1 // pred_check_branch
      %19 = sbr.rel (0) target = $region9
    $region8: #{tpu_custom_call.1} parent=1 // pred_region
      %s20 = sadd.s32 0, 0
      %22 = vsyncadd [#allocation4], 0
      %s23 = smul.addr %s20, 8
      %s24 = scalar_lea.hbm %s1, %s23
      %s26 = sshll.u32 %s24, 4
      %s27 = int_to_ptr.hbm [resolvable:$true] %s26
      %s28 = sshll.u32 [#allocation3], 4
      %s29 = int_to_ptr.vmem [resolvable:$true] %s28
      %31 = dma.hbm_to_vmem [thread:$0]  %s27, 128, %s29, [#allocation4]
    $region9: #{tpu_custom_call.1} parent=1 // pred_fallthru
      _
    // Predicated region
    $region10: #{tpu_custom_call.1} parent=1 // pred_check
      _
    $region11: #{tpu_custom_call.1} parent=1 // pred_check_branch
      %33 = sbr.rel (0) target = $region13
    $region12: #{tpu_custom_call.1} parent=1 // pred_region
      %s34 = sadd.s32 0, 0
      %p35 = scmp.lt.s32.totalorder %s34, 0
      %s36 = scalar_select %p35, %s34, 0
      %s37 = smul.addr %s36, 8
      %s38 = scalar_lea.vmem %s2, %s37
      %s39 = sadd.s32 0, 0
    $region13: #{tpu_custom_call.1} parent=1 // pred_fallthru
      _
    // Predicated region
    $region14: #{tpu_custom_call.1} parent=1 // pred_check
      _
    $region15: #{tpu_custom_call.1} parent=1 // pred_check_branch
      %41 = sbr.rel (0) target = $region17
    $region16: #{tpu_custom_call.1} parent=1 // pred_region
      %43 = dma.done [#allocation4], 128
    $region17: #{tpu_custom_call.1} parent=1 // pred_fallthru
      _
    %s44 = sadd.s32 0, 0
    %p45 = scmp.lt.s32.totalorder %s44, 0
    %s46 = scalar_select %p45, %s44, 0
    %s47 = smul.addr %s46, 8
    %s48 = scalar_lea.vmem %s0, %s47
    %s49 = sadd.s32 0, 0
    %p50 = scmp.lt.s32.totalorder %s49, 0
    %s51 = scalar_select %p50, %s49, 0
    %s52 = smul.addr %s51, 8
    %s53 = scalar_lea.vmem %s2, %s52
    %s54 = sadd.s32 0, 0
    %p55 = scmp.lt.s32.totalorder %s54, 0
    %s56 = scalar_select %p55, %s54, 0
    %s57 = smul.addr %s56, 8
    %s58 = scalar_lea.vmem %s0, %s57
    %s59 = sadd.s32 0, 0
    %s60 = sadd.s32 0, 0
    %s61 = sadd.s32 0, 0
    %p62 = scmp.lt.s32.totalorder %s61, 0
    %s63 = scalar_select %p62, %s61, 0
    %s64 = smul.addr %s63, 8
    %s65 = scalar_lea.vmem %s2, %s64
    %s66 = sadd.s32 0, 0
    %p67 = scmp.eq.s32.totalorder 0, 0
    // Predicated region
    $region18: #{tpu_custom_call.1} parent=1 // pred_check
      %p68 = pneg %p67
    $region19: #{tpu_custom_call.1} parent=1 // pred_check_branch
      %70 = sbr.rel (%p68) target = $region21
    $region20: #{tpu_custom_call.1} parent=1 // pred_region
      %vm71 = vcmask 0
      %72 = vst.msk [vmem:[#allocation2] sm:$0x1] %vm71, 0.0
    $region21: #{tpu_custom_call.1} parent=1 // pred_fallthru
      _
    %v73 = vld [vmem:[%s58] sm:$0xff]
    %v74 = vld [vmem:[#allocation3] sm:$0xff]
    %v75 = vsub.f32 %v73, %v74
    %v76 = vadd.f32 %v75, 1e-06
    %v77 = vmul.f32 %v76, %v76
    %78 = vadd.xlane.f32.xlu0 %v77
    %v79 = vpop.xlane.xlu0 %78
    %v80 = vrsqrt.pop %v79
    %v81 = vmul.f32 %v80, %v79
    %v82 = vmul.f32 %v81, %v80
    %v83 = vmul.f32 0.5, %v82
    %v84 = vsub.f32 1.5, %v83
    %v85 = vmul.f32 %v80, %v84
    %v86 = vmul.f32 %v79, %v85
    %vm87 = vcmp.eq.f32.partialorder %v79, inf
    %v88 = vsel %vm87, %v79, %v86
    %vm89 = vcmp.eq.f32.partialorder %v79, 0.0
    %v90 = vand.u32 %v79, 2147483648
    %v91 = vsel %vm89, %v90, %v88
    %v92 = vsub.f32 2.0, %v91
    %v93 = vmax.f32 %v92, 0.0
    %v94 = vld [vmem:[%s65] sm:$0xff]
    %v95 = vsub.f32 1.0, %v94
    %v96 = vmul.f32 %v95, %v79
    %v97 = vmul.f32 %v93, %v93
    %v98 = vmul.f32 %v94, %v97
    %v99 = vadd.f32 %v96, %v98
    %v100 = vld [vmem:[#allocation2] sm:$0x1]
    %vm101 = vcmask 7168
    %v102 = vsel %vm101, %v99, 0.0
    %v103 = vrot.slane %v102, 4
    %v104 = vadd.f32 %v102, %v103
    %v105 = vrot.slane %v104, 2
    %v106 = vadd.f32 %v104, %v105
    %v107 = vrot.slane %v106, 1
    %v108 = vadd.f32 %v106, %v107
    %v109 = vadd.f32 %v100, %v108
    %vm110 = vcmask 0
    %111 = vst.msk [vmem:[#allocation2] sm:$0x1] %vm110, %v109
    // Predicated region
    $region22: #{tpu_custom_call.1} parent=1 // pred_check
      %p112 = pneg %p67
    $region23: #{tpu_custom_call.1} parent=1 // pred_check_branch
      %114 = sbr.rel (%p112) target = $region25
    $region24: #{tpu_custom_call.1} parent=1 // pred_region
      %v115 = vld [vmem:[#allocation2] sm:$0x1]
      %v117 = vperm.slane %v115, 0
      %118 = vset.pattern.permute.xlu0 0
      %119 = vperm.xlu0 %118, %v117
      %v120 = vpop.permute.xlu0 %119
      %122 = vst [vmem:[#allocation6] sm:$0xff] %v120
    $region25: #{tpu_custom_call.1} parent=1 // pred_fallthru
      _
    // Predicated region
    $region26: #{tpu_custom_call.1} parent=1 // pred_check
      _
    $region27: #{tpu_custom_call.1} parent=1 // pred_check_branch
      %124 = sbr.rel (0) target = $region29
    $region28: #{tpu_custom_call.1} parent=1 // pred_region
      %126 = vsyncadd [#allocation5], 0
      %s128 = sshll.u32 [#allocation6], 4
      %s129 = int_to_ptr.vmem [resolvable:$true] %s128
      %s130 = sshll.u32 %s3, 4
      %s131 = int_to_ptr.hbm [resolvable:$true] %s130
      %133 = dma.vmem_to_hbm [thread:$0]  %s129, 128, %s131, [#allocation5]
    $region29: #{tpu_custom_call.1} parent=1 // pred_fallthru
      _
    // Predicated region
    $region30: #{tpu_custom_call.1} parent=1 // pred_check
      _
    $region31: #{tpu_custom_call.1} parent=1 // pred_check_branch
      %135 = sbr.rel (0) target = $region33
    $region32: #{tpu_custom_call.1} parent=1 // pred_region
      %137 = dma.done [#allocation5], 128
    $region33: #{tpu_custom_call.1} parent=1 // pred_fallthru
      _
    %138 = vsyncpa [#allocation4], 1
    %139 = vsyncpa [#allocation5], 1

</llo_original>
